<compile_context>
chip_gen: v6e
topology: v6e:2x2x1
jax: 0.10.0
libtpu: 0.0.40
codegen_flags: <defaults>
</compile_context>

<pallas_src>
import math

import jax
import jax.numpy as jnp
import numpy as np
from jax.experimental import pallas as pl
from jax.experimental.pallas import tpu as pltpu


def _round_up(x, m):
    return ((x + m - 1) // m) * m


def _pad2d(x, rows, cols):
    r, c = x.shape
    if r == rows and c == cols:
        return x
    return jnp.pad(x, ((0, rows - r), (0, cols - c)))


def _pick_row_tile(m_pad, tm_max):
    """Row tile: as large as possible, but guarantee >=2 row tiles when M allows
    so the 'parallel' axis can be sharded across v7x's two TensorCores."""
    half = max(128, (m_pad // 2) // 128 * 128)
    return min(tm_max, half, m_pad)


def _pick_col_tile(c_pad, tn_max):
    """Column tile: full width when it fits, otherwise the largest 128-multiple
    divisor of c_pad <= tn_max (keeps per-step VMEM bounded for huge F_out,
    e.g. on v7x's 64 MiB VMEM, without adding column padding)."""
    if c_pad <= tn_max:
        return c_pad
    for cand in range(tn_max // 128, 0, -1):
        tn = cand * 128
        if c_pad % tn == 0:
            return tn
    return 128  # unreachable: c_pad is a multiple of 128


# ----------------------------- kernels ------------------------------------- #

def _mm_fast_kernel(a_ref, b_ref, o_ref):
    """Single K step: straight MXU dot -> store (no scratch, no conditionals)."""
    o_ref[...] = jnp.dot(a_ref[...], b_ref[...],
                         preferred_element_type=jnp.float32).astype(o_ref.dtype)


def _mm_fast_bias_kernel(a_ref, b_ref, bias_ref, o_ref):
    o_ref[...] = (jnp.dot(a_ref[...], b_ref[...],
                          preferred_element_type=jnp.float32)
                  + bias_ref[...]).astype(o_ref.dtype)


def _mm_acc_kernel(a_ref, b_ref, o_ref, acc_ref):
    """K-tiled: f32 accumulator carried across the (last, 'arbitrary') K axis."""
    @pl.when(pl.program_id(2) == 0)
    def _():
        acc_ref[...] = jnp.zeros_like(acc_ref)

    acc_ref[...] += jnp.dot(a_ref[...], b_ref[...],
                            preferred_element_type=jnp.float32)

    @pl.when(pl.program_id(2) == pl.num_programs(2) - 1)
    def _():
        o_ref[...] = acc_ref[...].astype(o_ref.dtype)


def _mm_acc_bias_kernel(a_ref, b_ref, bias_ref, o_ref, acc_ref):
    @pl.when(pl.program_id(2) == 0)
    def _():
        acc_ref[...] = jnp.zeros_like(acc_ref)

    acc_ref[...] += jnp.dot(a_ref[...], b_ref[...],
                            preferred_element_type=jnp.float32)

    @pl.when(pl.program_id(2) == pl.num_programs(2) - 1)
    def _():
        o_ref[...] = (acc_ref[...] + bias_ref[...]).astype(o_ref.dtype)


# --------------------------- tiled matmul ----------------------------------- #

def _tiled_matmul(a, b, bias=None, *, out_dtype,
                  tm_max=512, tn_max=1024, tk_max=2048,
                  vmem_limit_bytes=32 * 1024 * 1024):
    """out = a @ b (+ bias). Row/col axes 'parallel', optional K axis 'arbitrary'."""
    M, K = a.shape
    K2, C = b.shape
    assert K == K2

    m_pad = _round_up(M, 128)
    k_pad = _round_up(K, 128)
    c_pad = _round_up(C, 128)

    tm = _pick_row_tile(m_pad, tm_max)
    m_pad = _round_up(m_pad, tm)
    tn = _pick_col_tile(c_pad, tn_max)

    single_k = k_pad <= tk_max
    if single_k:
        tk = k_pad
    else:
        tk = tk_max
        k_pad = _round_up(k_pad, tk)     # zero-padded K tiles contribute exactly 0

    a_p = _pad2d(a, m_pad, k_pad)
    b_p = _pad2d(b, k_pad, c_pad)

    args = [a_p, b_p]
    have_bias = bias is not None
    if have_bias:
        bias_p = _pad2d(bias.reshape(1, -1).astype(jnp.float32), 1, c_pad)
        args.append(bias_p)

    out_itemsize = np.dtype(out_dtype).itemsize
    cost = pl.CostEstimate(
        flops=2 * m_pad * k_pad * c_pad,
        transcendentals=0,
        bytes_accessed=(a_p.size * np.dtype(a_p.dtype).itemsize
                        + b_p.size * np.dtype(b_p.dtype).itemsize
                        + m_pad * c_pad * out_itemsize),
    )

    if single_k:
        # Fast path: B is a constant block across the row axis -> VMEM-resident,
        # adj (A) is streamed exactly once.  No scratch, no pl.when.
        grid = (m_pad // tm, c_pad // tn)
        in_specs = [
            pl.BlockSpec((tm, k_pad), lambda i, j: (i, 0)),
            pl.BlockSpec((k_pad, tn), lambda i, j: (0, j)),
        ]
        if have_bias:
            in_specs.append(pl.BlockSpec((1, tn), lambda i, j: (0, j)))
        out_specs = pl.BlockSpec((tm, tn), lambda i, j: (i, j))
        scratch = []
        kernel = _mm_fast_bias_kernel if have_bias else _mm_fast_kernel
        dims = ("parallel", "parallel")
    else:
        grid = (m_pad // tm, c_pad // tn, k_pad // tk)   # reduction axis last
        in_specs = [
            pl.BlockSpec((tm, tk), lambda i, j, k: (i, k)),
            pl.BlockSpec((tk, tn), lambda i, j, k: (k, j)),
        ]
        if have_bias:
            in_specs.append(pl.BlockSpec((1, tn), lambda i, j, k: (0, j)))
        out_specs = pl.BlockSpec((tm, tn), lambda i, j, k: (i, j))
        scratch = [pltpu.VMEM((tm, tn), jnp.float32)]
        kernel = _mm_acc_bias_kernel if have_bias else _mm_acc_kernel
        dims = ("parallel", "parallel", "arbitrary")

    out = pl.pallas_call(
        kernel,
        out_shape=jax.ShapeDtypeStruct((m_pad, c_pad), out_dtype),
        grid_spec=pltpu.PrefetchScalarGridSpec(
            num_scalar_prefetch=0,
            grid=grid,
            in_specs=in_specs,
            out_specs=out_specs,
            scratch_shapes=scratch,
        ),
        compiler_params=pltpu.CompilerParams(
            dimension_semantics=dims,
            vmem_limit_bytes=vmem_limit_bytes,
        ),
        cost_estimate=cost,
    )(*args)

    if m_pad != M or c_pad != C:
        out = out[:M, :C]
    return out


# --------------------------- GCN layer wrapper ------------------------------ #

def graph_convolution(x, adj, weight, bias=None, *, compute_dtype=jnp.bfloat16):
    """GCN forward: adj @ (x @ weight) + bias (association order chosen by shape)."""
    N, f_in = x.shape
    f_out = weight.shape[1]
    assert adj.shape == (N, N)
    assert weight.shape == (f_in, f_out)
    out_dtype = x.dtype

    # Keep adj at rest in the compute dtype (bf16): callers should cast ONCE and
    # reuse across layers/calls so no extra N^2-byte cast pass runs per forward.
    adjc = adj if adj.dtype == compute_dtype else adj.astype(compute_dtype)
    xc = x.astype(compute_dtype)
    wc = weight.astype(compute_dtype)

    if f_in < f_out:
        # (adj @ x) @ W + b : aggregate over the narrower feature dimension first.
        agg = _tiled_matmul(adjc, xc, None, out_dtype=compute_dtype)   # (N, f_in)
        out = _tiled_matmul(agg, wc, bias, out_dtype=out_dtype)        # (N, f_out)
    else:
        # adj @ (x @ W) + b : classic order (e.g. F_in=1433 -> F_out=16).
        sup = _tiled_matmul(xc, wc, None, out_dtype=compute_dtype)     # (N, f_out)
        out = _tiled_matmul(adjc, sup, bias, out_dtype=out_dtype)      # (N, f_out)
    return out


def init_params(key, in_features, out_features):
    """Matches reset_parameters(): U(-stdv, stdv), stdv = 1/sqrt(F_out)."""
    stdv = 1.0 / math.sqrt(out_features)
    kw, kb = jax.random.split(key)
    weight = jax.random.uniform(
        kw, (in_features, out_features), jnp.float32, minval=-stdv, maxval=stdv)
    bias = jax.random.uniform(
        kb, (out_features,), jnp.float32, minval=-stdv, maxval=stdv)
    return weight, bias


if __name__ == "__main__":
    # Small shapes: N nodes, F_IN -> F_OUT
    N, F_IN, F_OUT = 256, 64, 128

    key = jax.random.PRNGKey(0)
    kx, kadj, kp = jax.random.split(key, 3)

    x = jax.random.normal(kx, (N, F_IN), jnp.float32)
    # Symmetric, roughly normalized dense adjacency (reference kept in f32).
    a = jax.random.uniform(kadj, (N, N), jnp.float32)
    adj_f32 = (a + a.T) / (2.0 * N)
    # adj kept at rest in bf16: cast ONCE here, reused by every layer/call, so
    # the kernel never pays a separate 4*N^2-byte cast pass before the adj matmul.
    adj = adj_f32.astype(jnp.bfloat16)

    weight, bias = init_params(kp, F_IN, F_OUT)

    gcn = jax.jit(graph_convolution)
    out = jax.block_until_ready(gcn(x, adj, weight, bias))

    # Reference check (plain JAX, f32). Kernel uses bf16 operands with f32
    # accumulation, so use mixed-precision tolerances.
    ref = adj_f32 @ (x @ weight) + bias[None, :]
    np.testing.assert_allclose(np.asarray(out), np.asarray(ref), rtol=5e-2, atol=1e-2)

    print("KERNEL_OK")
</pallas_src>

<mosaic_0001>
module attributes {stable_mosaic.version = 11 : i64} {
  func.func @_mm_fast_bias_kernel(%arg0: i32, %arg1: i32, %arg2: memref<128x128xbf16, #tpu.memory_space<vmem>>, %arg3: memref<128x128xbf16, #tpu.memory_space<vmem>>, %arg4: memref<1x128xf32, #tpu.memory_space<vmem>>, %arg5: memref<128x128xf32, #tpu.memory_space<vmem>>) attributes {dimension_semantics = [#tpu.dimension_semantics<parallel>, #tpu.dimension_semantics<parallel>], iteration_bounds = array<i64: 2, 1>, scalar_prefetch = 0 : i64, scratch_operands = 0 : i64, tpu.core_type = #tpu.core_type<tc>, window_params = [{transform_indices = @transform_0, window_bounds = array<i64: 128, 128>}, {transform_indices = @transform_1, window_bounds = array<i64: 128, 128>}, {transform_indices = @transform_2, window_bounds = array<i64: 1, 128>}, {transform_indices = @transform_3, window_bounds = array<i64: 128, 128>}]} {
    %c0 = arith.constant 0 : index
    %c0_0 = arith.constant 0 : index
    %0 = vector.load %arg2[%c0, %c0_0] : memref<128x128xbf16, #tpu.memory_space<vmem>>, vector<128x128xbf16>
    %c0_1 = arith.constant 0 : index
    %c0_2 = arith.constant 0 : index
    %1 = vector.load %arg3[%c0_1, %c0_2] : memref<128x128xbf16, #tpu.memory_space<vmem>>, vector<128x128xbf16>
    %cst = arith.constant dense<0.000000e+00> : vector<128x128xf32>
    %2 = tpu.matmul %0, %1, %cst {dimension_numbers = #tpu.dot_dimension_numbers<[1], [0], [0], [1], [0, 0, 1, 1], [], []>} : vector<128x128xbf16>, vector<128x128xbf16>, vector<128x128xf32> -> vector<128x128xf32>
    %c0_3 = arith.constant 0 : index
    %c0_4 = arith.constant 0 : index
    %3 = vector.load %arg4[%c0_3, %c0_4] : memref<1x128xf32, #tpu.memory_space<vmem>>, vector<1x128xf32>
    %4 = vector.broadcast %3 : vector<1x128xf32> to vector<128x128xf32>
    %5 = arith.addf %2, %4 : vector<128x128xf32>
    %c0_5 = arith.constant 0 : index
    %c0_6 = arith.constant 0 : index
    %6 = vector.load %arg5[%c0_5, %c0_6] : memref<128x128xf32, #tpu.memory_space<vmem>>, vector<128x128xf32>
    tpu.vector_store %arg5[%c0_5, %c0_6], %5 {strides = array<i32>} : memref<128x128xf32, #tpu.memory_space<vmem>>, vector<128x128xf32>,
    return
  }
  func.func @transform_0(%arg0: i32, %arg1: i32) -> (i32, i32) {
    %c0_i32 = arith.constant 0 : i32
    %c0_i32_0 = arith.constant 0 : i32
    return %arg0, %c0_i32 : i32, i32
  }
  func.func @transform_1(%arg0: i32, %arg1: i32) -> (i32, i32) {
    %c0_i32 = arith.constant 0 : i32
    %c0_i32_0 = arith.constant 0 : i32
    return %c0_i32, %arg1 : i32, i32
  }
  func.func @transform_2(%arg0: i32, %arg1: i32) -> (i32, i32) {
    %c0_i32 = arith.constant 0 : i32
    %c0_i32_0 = arith.constant 0 : i32
    return %c0_i32, %arg1 : i32, i32
  }
  func.func @transform_3(%arg0: i32, %arg1: i32) -> (i32, i32) {
    %c0_i32 = arith.constant 0 : i32
    return %arg0, %arg1 : i32, i32
  }
}

module attributes {stable_mosaic.version = 11 : i64} {
  func.func @_mm_fast_kernel(%arg0: i32, %arg1: i32, %arg2: memref<128x256xbf16, #tpu.memory_space<vmem>>, %arg3: memref<256x128xbf16, #tpu.memory_space<vmem>>, %arg4: memref<128x128xbf16, #tpu.memory_space<vmem>>) attributes {dimension_semantics = [#tpu.dimension_semantics<parallel>, #tpu.dimension_semantics<parallel>], iteration_bounds = array<i64: 2, 1>, scalar_prefetch = 0 : i64, scratch_operands = 0 : i64, tpu.core_type = #tpu.core_type<tc>, window_params = [{transform_indices = @transform_0, window_bounds = array<i64: 128, 256>}, {transform_indices = @transform_1, window_bounds = array<i64: 256, 128>}, {transform_indices = @transform_2, window_bounds = array<i64: 128, 128>}]} {
    %c0 = arith.constant 0 : index
    %c0_0 = arith.constant 0 : index
    %0 = vector.load %arg2[%c0, %c0_0] : memref<128x256xbf16, #tpu.memory_space<vmem>>, vector<128x256xbf16>
    %c0_1 = arith.constant 0 : index
    %c0_2 = arith.constant 0 : index
    %1 = vector.load %arg3[%c0_1, %c0_2] : memref<256x128xbf16, #tpu.memory_space<vmem>>, vector<256x128xbf16>
    %cst = arith.constant dense<0.000000e+00> : vector<128x128xf32>
    %2 = tpu.matmul %0, %1, %cst {dimension_numbers = #tpu.dot_dimension_numbers<[1], [0], [0], [1], [0, 0, 1, 1], [], []>} : vector<128x256xbf16>, vector<256x128xbf16>, vector<128x128xf32> -> vector<128x128xf32>
    %3 = arith.truncf %2 : vector<128x128xf32> to vector<128x128xbf16>
    %c0_3 = arith.constant 0 : index
    %c0_4 = arith.constant 0 : index
    %4 = vector.load %arg4[%c0_3, %c0_4] : memref<128x128xbf16, #tpu.memory_space<vmem>>, vector<128x128xbf16>
    tpu.vector_store %arg4[%c0_3, %c0_4], %3 {strides = array<i32>} : memref<128x128xbf16, #tpu.memory_space<vmem>>, vector<128x128xbf16>,
    return
  }
  func.func @transform_0(%arg0: i32, %arg1: i32) -> (i32, i32) {
    %c0_i32 = arith.constant 0 : i32
    %c0_i32_0 = arith.constant 0 : i32
    return %arg0, %c0_i32 : i32, i32
  }
  func.func @transform_1(%arg0: i32, %arg1: i32) -> (i32, i32) {
    %c0_i32 = arith.constant 0 : i32
    %c0_i32_0 = arith.constant 0 : i32
    return %c0_i32, %arg1 : i32, i32
  }
  func.func @transform_2(%arg0: i32, %arg1: i32) -> (i32, i32) {
    %c0_i32 = arith.constant 0 : i32
    return %arg0, %arg1 : i32, i32
  }
}

</mosaic_0001>

<llo_original>
// kernel: graph_convolution.3
$region0: #{graph_convolution.3}
  #allocation0 [shape = 'u32[]', space=smem, size = 0x4, offset = 0x4, fixed_abs, tag = 'smem constant byte address 0x4 - core index']
  #allocation1 [shape = 'u32[144,128]{1,0:T(1,128)}', space=vmem, size = 0x12000, scoped, tag = 'internal scratch']
  %s0 = inlined_call_operand.vmem [shape: bf16[256,128], index: 0, kind: input, shape index: {}]
  %s1 = inlined_call_operand.vmem [shape: bf16[128,128], index: 1, kind: input, shape index: {}]
  %s2 = inlined_call_operand.vmem [shape: f32[1,128], index: 2, kind: input, shape index: {}]
  %s3 = inlined_call_operand.hbm [shape: f32[256,128], index: 3, kind: output, shape index: {}]
  %s4 = sld [smem:[#allocation0]]
  $region45: #{graph_convolution.3} parent=0
    _
  %s6 = ssub.s32 1, %s4
  %s7 = scalar_select 0, %s6, %s4
  $region1: #{graph_convolution.3} parent=0
    #allocation2 [shape = 'u8[131072]{0}', space=vmem, size = 0x20000, scoped, tag = 'output window, operand 0']
    #allocation3 [shape = 's32[2]{0}', space=sflag, size = 0x8, scoped, tag = 'scoped memory for graph_convolution.3']
    %8 = vsyncpa [#allocation3], 0
    %s9 = scalar_lea.sflag [#allocation3], 1
    %10 = vsyncpa %s9, 0
    loop: start=0, step=1, limit=4
    $region2: #{graph_convolution.3} parent=1 // loop_pre_header
      _
    $region3: #{graph_convolution.3} parent=1 // loop_header
      %s12 = sphi 0, %s16
      %p13 = scmp.ge.s32.totalorder %s12, 4
      %s19 = sphi 0, %s31
      %s20 = sphi 0, %s27
      %s21 = sphi 0, %s19
      %s22 = sphi 0, %s20
      %s23 = sphi 0, %s21
      %s24 = sphi 0, %s22
      %s34 = sphi 0, %s36
      %s37 = sphi 0, %s34
      %s38 = sphi 0, %s37
      %s54 = sphi 0, %s38
      %s60 = sphi 0, %s62
      %s63 = sphi 0, %s60
      %s64 = sphi 0, %s63
      %s80 = sphi 0, %s64
      %s86 = sphi 0, %s88
      %s89 = sphi 0, %s86
      %s90 = sphi 0, %s89
      %s106 = sphi 0, %s90
      %s114 = sphi 0, %s116
      %s117 = sphi 0, %s114
      %s118 = sphi 0, %s117
      %s134 = sphi 0, %s118
    $region4: #{graph_convolution.3} parent=1 // loop_header_branch
      %15 = sbr.rel (%p13) target = $region8
    $region5: #{graph_convolution.3} parent=1 // loop_body
      %s17 = ssub.s32 %s12, 1
      %s18 = ssub.s32 %s12, 2
      %s25 = sadd.s32 1, %s20
      %p26 = scmp.ge.s32.totalorder %s25, 1
      %s27 = scalar_select %p26, 0, %s25
      %s28 = sadd.s32 1, %s19
      %s29 = scalar_select %p26, %s28, %s19
      %p30 = scmp.ge.s32.totalorder %s29, 2
      %s31 = scalar_select %p30, 0, %s29
      %s32 = ssub.s32 %s19, %s31
      %p33 = scmp.eq.s32.totalorder %s32, 0
      %s35 = sadd.s32 %s34, 1
      %s36 = scalar_select %p33, %s34, %s35
      %p39 = pneg %p33
      %p40 = scmp.eq.s32.totalorder %s12, 1
      %p41 = por %p39, %p40
      %p42 = scmp.ne.s32.totalorder %s34, %s37
      %p43 = scmp.eq.s32.totalorder %s12, 0
      %p44 = por %p42, %p43
      %p45 = scmp.ne.s32.totalorder %s34, %s37
      %p46 = scmp.eq.s32.totalorder %s17, 1
      %p47 = por %p45, %p46
      %p48 = scmp.ne.s32.totalorder %s37, %s38
      %p49 = scmp.eq.s32.totalorder %s17, 0
      %p50 = por %p48, %p49
      %p51 = scmp.ne.s32.totalorder %s37, %s38
      %p52 = scmp.eq.s32.totalorder %s18, 1
      %p53 = por %p51, %p52
      %p55 = scmp.ne.s32.totalorder %s38, %s54
      %p56 = scmp.eq.s32.totalorder %s18, 0
      %p57 = por %p55, %p56
      %s58 = ssub.s32 %s20, %s27
      %p59 = scmp.eq.s32.totalorder %s58, 0
      %s61 = sadd.s32 %s60, 1
      %s62 = scalar_select %p59, %s60, %s61
      %p65 = pneg %p59
      %p66 = scmp.eq.s32.totalorder %s12, 1
      %p67 = por %p65, %p66
      %p68 = scmp.ne.s32.totalorder %s60, %s63
      %p69 = scmp.eq.s32.totalorder %s12, 0
      %p70 = por %p68, %p69
      %p71 = scmp.ne.s32.totalorder %s60, %s63
      %p72 = scmp.eq.s32.totalorder %s17, 1
      %p73 = por %p71, %p72
      %p74 = scmp.ne.s32.totalorder %s63, %s64
      %p75 = scmp.eq.s32.totalorder %s17, 0
      %p76 = por %p74, %p75
      %p77 = scmp.ne.s32.totalorder %s63, %s64
      %p78 = scmp.eq.s32.totalorder %s18, 1
      %p79 = por %p77, %p78
      %p81 = scmp.ne.s32.totalorder %s64, %s80
      %p82 = scmp.eq.s32.totalorder %s18, 0
      %p83 = por %p81, %p82
      %s84 = ssub.s32 %s20, %s27
      %p85 = scmp.eq.s32.totalorder %s84, 0
      %s87 = sadd.s32 %s86, 1
      %s88 = scalar_select %p85, %s86, %s87
      %p91 = pneg %p85
      %p92 = scmp.eq.s32.totalorder %s12, 1
      %p93 = por %p91, %p92
      %p94 = scmp.ne.s32.totalorder %s86, %s89
      %p95 = scmp.eq.s32.totalorder %s12, 0
      %p96 = por %p94, %p95
      %p97 = scmp.ne.s32.totalorder %s86, %s89
      %p98 = scmp.eq.s32.totalorder %s17, 1
      %p99 = por %p97, %p98
      %p100 = scmp.ne.s32.totalorder %s89, %s90
      %p101 = scmp.eq.s32.totalorder %s17, 0
      %p102 = por %p100, %p101
      %p103 = scmp.ne.s32.totalorder %s89, %s90
      %p104 = scmp.eq.s32.totalorder %s18, 1
      %p105 = por %p103, %p104
      %p107 = scmp.ne.s32.totalorder %s90, %s106
      %p108 = scmp.eq.s32.totalorder %s18, 0
      %p109 = por %p107, %p108
      %s110 = ssub.s32 %s19, %s31
      %s111 = ssub.s32 %s20, %s27
      %s112 = sor.u32 %s110, %s111
      %p113 = scmp.eq.s32.totalorder %s112, 0
      %s115 = sadd.s32 %s114, 1
      %s116 = scalar_select %p113, %s114, %s115
      %p119 = pneg %p113
      %p120 = scmp.eq.s32.totalorder %s12, 1
      %p121 = por %p119, %p120
      %p122 = scmp.ne.s32.totalorder %s114, %s117
      %p123 = scmp.eq.s32.totalorder %s12, 0
      %p124 = por %p122, %p123
      %p125 = scmp.ne.s32.totalorder %s114, %s117
      %p126 = scmp.eq.s32.totalorder %s17, 1
      %p127 = por %p125, %p126
      %p128 = scmp.ne.s32.totalorder %s117, %s118
      %p129 = scmp.eq.s32.totalorder %s17, 0
      %p130 = por %p128, %p129
      %p131 = scmp.ne.s32.totalorder %s117, %s118
      %p132 = scmp.eq.s32.totalorder %s18, 1
      %p133 = por %p131, %p132
      %p135 = scmp.ne.s32.totalorder %s118, %s134
      %p136 = scmp.eq.s32.totalorder %s18, 0
      %p137 = por %p135, %p136
      %p138 = scmp.le.s32.totalorder 1, %s12
      %p139 = scmp.lt.s32.totalorder %s12, 3
      %p140 = pnand %p138, %p139
      %p141 = pneg %p140
      // Predicated region
      $region9: #{graph_convolution.3} parent=5 // pred_check
        _
      $region10: #{graph_convolution.3} parent=5 // pred_check_branch
        %143 = sbr.rel (%p140) target = $region12
      $region11: #{graph_convolution.3} parent=5 // pred_region
        %s144 = ssub.s32 %s12, 1
        // Predicated region
        $region13: #{graph_convolution.3} parent=11 // pred_check
          %p145 = pneg %p76
        $region14: #{graph_convolution.3} parent=11 // pred_check_branch
          %147 = sbr.rel (%p145) target = $region16
        $region15: #{graph_convolution.3} parent=11 // pred_region
          %p148 = scmp.lt.s32.totalorder %s22, 0
          %s149 = scalar_select %p148, %s22, 0
          %s150 = smul.addr %s149, 4
          %s151 = scalar_lea.vmem %s1, %s150
        $region16: #{graph_convolution.3} parent=11 // pred_fallthru
          _
        // Predicated region
        $region17: #{graph_convolution.3} parent=11 // pred_check
          %p152 = pneg %p102
        $region18: #{graph_convolution.3} parent=11 // pred_check_branch
          %154 = sbr.rel (%p152) target = $region20
        $region19: #{graph_convolution.3} parent=11 // pred_region
          %p155 = scmp.lt.s32.totalorder %s22, 0
          %s156 = scalar_select %p155, %s22, 0
          %s157 = scalar_lea.vmem %s2, %s156
        $region20: #{graph_convolution.3} parent=11 // pred_fallthru
          _
      $region12: #{graph_convolution.3} parent=5 // pred_fallthru
        _
      %p158 = scmp.lt.s32.totalorder %s12, 2
      // Predicated region
      $region21: #{graph_convolution.3} parent=5 // pred_check
        %p159 = pneg %p158
      $region22: #{graph_convolution.3} parent=5 // pred_check_branch
        %161 = sbr.rel (%p159) target = $region24
      $region23: #{graph_convolution.3} parent=5 // pred_region
        // Predicated region
        $region25: #{graph_convolution.3} parent=23 // pred_check
          %p162 = pneg %p44
        $region26: #{graph_convolution.3} parent=23 // pred_check_branch
          %164 = sbr.rel (%p162) target = $region28
        $region27: #{graph_convolution.3} parent=23 // pred_region
          %s165 = smul.u32 16, %s19
          %p166 = scmp.lt.s32.totalorder %s165, 31
          %s167 = scalar_select %p166, %s165, 31
          %s168 = smul.addr %s167, 4
          %s169 = scalar_lea.vmem %s0, %s168
          %s170 = smul.u32 16, %s19
        $region28: #{graph_convolution.3} parent=23 // pred_fallthru
          _
      $region24: #{graph_convolution.3} parent=5 // pred_fallthru
        _
      %p171 = scmp.le.s32.totalorder 1, %s12
      %p172 = scmp.lt.s32.totalorder %s12, 3
      %p173 = pnand %p171, %p172
      %p174 = pneg %p173
      // Predicated region
      $region29: #{graph_convolution.3} parent=5 // pred_check
        _
      $region30: #{graph_convolution.3} parent=5 // pred_check_branch
        %176 = sbr.rel (%p173) target = $region32
      $region31: #{graph_convolution.3} parent=5 // pred_region
        %s177 = ssub.s32 %s12, 1
        %s178 = smul.u32 16, %s21
        %p179 = scmp.lt.s32.totalorder %s178, 31
        %s180 = scalar_select %p179, %s178, 31
        %s181 = smul.addr %s180, 4
        %s182 = scalar_lea.vmem %s0, %s181
        %p183 = pneg %p50
        %p184 = pneg %p47
        %p185 = scmp.lt.s32.totalorder %s22, 0
        %s186 = scalar_select %p185, %s22, 0
        %s187 = smul.addr %s186, 4
        %s188 = scalar_lea.vmem %s1, %s187
        %p189 = pneg %p76
        %p190 = pneg %p73
        %p191 = scmp.lt.s32.totalorder %s22, 0
        %s192 = scalar_select %p191, %s22, 0
        %s193 = scalar_lea.vmem %s2, %s192
        %p194 = pneg %p102
        %p195 = pneg %p99
        %p196 = pneg %p130
        %p197 = pneg %p127
        %s198 = sand.u32 %s117, 1
        %s199 = scalar_lea.sflag [#allocation3], %s198
        %s200 = sand.u32 %s117, 1
        %s201 = smul.addr %s200, 128
        %s202 = scalar_lea.vmem [#allocation2], %s201
        %s203 = smul.u32 16, %s21
        %p204 = scmp.lt.s32.totalorder %s203, 31
        %s205 = scalar_select %p204, %s203, 31
        %s206 = smul.addr %s205, 4
        %s207 = scalar_lea.vmem %s0, %s206
        %s208 = smul.u32 16, %s21
        %p209 = scmp.lt.s32.totalorder %s22, 0
        %s210 = scalar_select %p209, %s22, 0
        %s211 = smul.addr %s210, 4
        %s212 = scalar_lea.vmem %s1, %s211
        %p213 = scmp.lt.s32.totalorder %s22, 0
        %s214 = scalar_select %p213, %s22, 0
        %s215 = scalar_lea.vmem %s2, %s214
        %s216 = smul.u32 16, %s21
        %v218 = vld [vmem:[%s207] sm:$0xf]
        %v219 = vld [vmem:[%s207 + $0x4] sm:$0xf]
        %v220 = vld [vmem:[%s207 + $0x8] sm:$0xf]
        %v221 = vld [vmem:[%s207 + $0xc] sm:$0xf]
        %v222 = vld [vmem:[%s207 + $0x10] sm:$0xf]
        %v223 = vld [vmem:[%s207 + $0x14] sm:$0xf]
        %v224 = vld [vmem:[%s207 + $0x18] sm:$0xf]
        %v225 = vld [vmem:[%s207 + $0x1c] sm:$0xf]
        %v226 = vld [vmem:[%s207 + $0x20] sm:$0xf]
        %v227 = vld [vmem:[%s207 + $0x24] sm:$0xf]
        %v228 = vld [vmem:[%s207 + $0x28] sm:$0xf]
        %v229 = vld [vmem:[%s207 + $0x2c] sm:$0xf]
        %v230 = vld [vmem:[%s207 + $0x30] sm:$0xf]
        %v231 = vld [vmem:[%s207 + $0x34] sm:$0xf]
        %v232 = vld [vmem:[%s207 + $0x38] sm:$0xf]
        %v233 = vld [vmem:[%s207 + $0x3c] sm:$0xf]
        %v234 = vld [vmem:[%s212] sm:$0xf]
        %v235 = vld [vmem:[%s212 + $0x4] sm:$0xf]
        %v236 = vld [vmem:[%s212 + $0x8] sm:$0xf]
        %v237 = vld [vmem:[%s212 + $0xc] sm:$0xf]
        %v238 = vld [vmem:[%s212 + $0x10] sm:$0xf]
        %v239 = vld [vmem:[%s212 + $0x14] sm:$0xf]
        %v240 = vld [vmem:[%s212 + $0x18] sm:$0xf]
        %v241 = vld [vmem:[%s212 + $0x1c] sm:$0xf]
        %v242 = vld [vmem:[%s212 + $0x20] sm:$0xf]
        %v243 = vld [vmem:[%s212 + $0x24] sm:$0xf]
        %v244 = vld [vmem:[%s212 + $0x28] sm:$0xf]
        %v245 = vld [vmem:[%s212 + $0x2c] sm:$0xf]
        %v246 = vld [vmem:[%s212 + $0x30] sm:$0xf]
        %v247 = vld [vmem:[%s212 + $0x34] sm:$0xf]
        %v248 = vld [vmem:[%s212 + $0x38] sm:$0xf]
        %v249 = vld [vmem:[%s212 + $0x3c] sm:$0xf]
        %v250 = vld [vmem:[%s215] sm:$0x1]
        %v252 = vlaneseq
        %v253 = vshrl.u32 %v252, 7
        %v254 = vsub.s32 0, %v253
        %v255 = vrot.slane %v250, %v254
        %v273 = vunpack.c.l.b16 %v218
        %v274 = vunpack.c.l.b16 %v219
        %v275 = vunpack.c.l.b16 %v220
        %v276 = vunpack.c.l.b16 %v221
        %v277 = vunpack.c.l.b16 %v222
        %v278 = vunpack.c.l.b16 %v223
        %v279 = vunpack.c.l.b16 %v224
        %v280 = vunpack.c.l.b16 %v225
        %v281 = vunpack.c.l.b16 %v226
        %v282 = vunpack.c.l.b16 %v227
        %v283 = vunpack.c.l.b16 %v228
        %v284 = vunpack.c.l.b16 %v229
        %v285 = vunpack.c.l.b16 %v230
        %v286 = vunpack.c.l.b16 %v231
        %v287 = vunpack.c.l.b16 %v232
        %v288 = vunpack.c.l.b16 %v233
        %v289 = vpack.c.b16 %v274, %v273
        %v290 = vpack.c.b16 %v276, %v275
        %v291 = vpack.c.b16 %v278, %v277
        %v292 = vpack.c.b16 %v280, %v279
        %v293 = vpack.c.b16 %v282, %v281
        %v294 = vpack.c.b16 %v284, %v283
        %v295 = vpack.c.b16 %v286, %v285
        %v296 = vpack.c.b16 %v288, %v287
        %v321 = vunpack.c.l.b16 %v234
        %v322 = vunpack.c.l.b16 %v235
        %v323 = vunpack.c.l.b16 %v236
        %v324 = vunpack.c.l.b16 %v237
        %v325 = vunpack.c.l.b16 %v238
        %v326 = vunpack.c.l.b16 %v239
        %v327 = vunpack.c.l.b16 %v240
        %v328 = vunpack.c.l.b16 %v241
        %v329 = vunpack.c.l.b16 %v242
        %v330 = vunpack.c.l.b16 %v243
        %v331 = vunpack.c.l.b16 %v244
        %v332 = vunpack.c.l.b16 %v245
        %v333 = vunpack.c.l.b16 %v246
        %v334 = vunpack.c.l.b16 %v247
        %v335 = vunpack.c.l.b16 %v248
        %v336 = vunpack.c.l.b16 %v249
        %v337 = vpack.c.b16 %v322, %v321
        %v338 = vpack.c.b16 %v324, %v323
        %v339 = vpack.c.b16 %v326, %v325
        %v340 = vpack.c.b16 %v328, %v327
        %v341 = vpack.c.b16 %v330, %v329
        %v342 = vpack.c.b16 %v332, %v331
        %v343 = vpack.c.b16 %v334, %v333
        %v344 = vpack.c.b16 %v336, %v335
        %353 = vmatprep.subr.bf16.mxu0 0
        %354 = vmatpush1.bf16.msra.mxu0 %v344
        %355 = vmatprep.subr.bf16.mxu0 0
        %356 = vmatpush1.bf16.msra.mxu0 %v343
        %357 = vmatprep.subr.bf16.mxu0 0
        %358 = vmatpush1.bf16.msra.mxu0 %v342
        %359 = vmatprep.subr.bf16.mxu0 0
        %360 = vmatpush1.bf16.msra.mxu0 %v341
        %361 = vmatprep.subr.bf16.mxu0 0
        %362 = vmatpush1.bf16.msra.mxu0 %v340
        %363 = vmatprep.subr.bf16.mxu0 0
        %364 = vmatpush1.bf16.msra.mxu0 %v339
        %365 = vmatprep.subr.bf16.mxu0 0
        %366 = vmatpush1.bf16.msra.mxu0 %v338
        %367 = vmatprep.subr.bf16.mxu0 0
        %368 = vmatpush1.bf16.msra.mxu0 %v337
        %369 = vmatprep.subr.bf16.mxu0 0
        %370 = vmatpush2.bf16.msra.mxu0 0
        %371 = vmatprep.subr.bf16.mxu0 0
        %372 = vmatpush2.bf16.msra.mxu0 0
        %373 = vmatprep.subr.bf16.mxu0 0
        %374 = vmatpush2.bf16.msra.mxu0 0
        %375 = vmatprep.subr.bf16.mxu0 0
        %376 = vmatpush2.bf16.msra.mxu0 0
        %377 = vmatprep.subr.bf16.mxu0 0
        %378 = vmatpush2.bf16.msra.mxu0 0
        %379 = vmatprep.subr.bf16.mxu0 0
        %380 = vmatpush2.bf16.msra.mxu0 0
        %381 = vmatprep.subr.bf16.mxu0 0
        %382 = vmatpush2.bf16.msra.mxu0 0
        %383 = vmatprep.subr.bf16.mxu0 0
        %384 = vmatpush2.bf16.msra.mxu0 0
        %385 = vmatprep.mubr.bf16.mxu0 0
        %386 = vmatmul.mubr.bf16.gmra.mxu0 %v289
        %v387 = vpop.f32.mrf.mxu0
        %v388 = vadd.f32 %v255, %v387
        %v389 = vpop.f32.mrf.mxu0
        %v390 = vpop.f32.mrf.mxu0
        %v391 = vadd.f32 %v255, %v390
        %v392 = vpop.f32.mrf.mxu0
        %393 = vmatprep.mubr.bf16.mxu0 0
        %394 = vmatmul.mubr.bf16.gmra.mxu0 %v290
        %v395 = vpop.f32.mrf.mxu0
        %v396 = vadd.f32 %v255, %v395
        %v397 = vpop.f32.mrf.mxu0
        %v398 = vpop.f32.mrf.mxu0
        %v399 = vadd.f32 %v255, %v398
        %v400 = vpop.f32.mrf.mxu0
        %401 = vmatprep.mubr.bf16.mxu0 0
        %402 = vmatmul.mubr.bf16.gmra.mxu0 %v291
        %v403 = vpop.f32.mrf.mxu0
        %v404 = vadd.f32 %v255, %v403
        %v405 = vpop.f32.mrf.mxu0
        %v406 = vpop.f32.mrf.mxu0
        %v407 = vadd.f32 %v255, %v406
        %v408 = vpop.f32.mrf.mxu0
        %409 = vmatprep.mubr.bf16.mxu0 0
        %410 = vmatmul.mubr.bf16.gmra.mxu0 %v292
        %v411 = vpop.f32.mrf.mxu0
        %v412 = vadd.f32 %v255, %v411
        %v413 = vpop.f32.mrf.mxu0
        %v414 = vpop.f32.mrf.mxu0
        %v415 = vadd.f32 %v255, %v414
        %v416 = vpop.f32.mrf.mxu0
        %417 = vmatprep.mubr.bf16.mxu0 0
        %418 = vmatmul.mubr.bf16.gmra.mxu0 %v293
        %v419 = vpop.f32.mrf.mxu0
        %v420 = vadd.f32 %v255, %v419
        %v421 = vpop.f32.mrf.mxu0
        %v422 = vpop.f32.mrf.mxu0
        %v423 = vadd.f32 %v255, %v422
        %v424 = vpop.f32.mrf.mxu0
        %425 = vmatprep.mubr.bf16.mxu0 0
        %426 = vmatmul.mubr.bf16.gmra.mxu0 %v294
        %v427 = vpop.f32.mrf.mxu0
        %v428 = vadd.f32 %v255, %v427
        %v429 = vpop.f32.mrf.mxu0
        %v430 = vpop.f32.mrf.mxu0
        %v431 = vadd.f32 %v255, %v430
        %v432 = vpop.f32.mrf.mxu0
        %433 = vmatprep.mubr.bf16.mxu0 0
        %434 = vmatmul.mubr.bf16.gmra.mxu0 %v295
        %v435 = vpop.f32.mrf.mxu0
        %v436 = vadd.f32 %v255, %v435
        %v437 = vpop.f32.mrf.mxu0
        %v438 = vpop.f32.mrf.mxu0
        %v439 = vadd.f32 %v255, %v438
        %v440 = vpop.f32.mrf.mxu0
        %441 = vmatprep.mubr.bf16.mxu0 0
        %442 = vmatmul.mubr.bf16.gmra.mxu0 %v296
        %v443 = vpop.f32.mrf.mxu0
        %v444 = vadd.f32 %v255, %v443
        %v445 = vpop.f32.mrf.mxu0
        %v446 = vpop.f32.mrf.mxu0
        %v447 = vadd.f32 %v255, %v446
        %v448 = vpop.f32.mrf.mxu0
        %449 = vdwg.mxu0
        %450 = vst [vmem:[%s202] sm:$0xff] %v388
        %451 = vst [vmem:[%s202 + $0x8] sm:$0xff] %v391
        %452 = vst [vmem:[%s202 + $0x10] sm:$0xff] %v396
        %453 = vst [vmem:[%s202 + $0x18] sm:$0xff] %v399
        %454 = vst [vmem:[%s202 + $0x20] sm:$0xff] %v404
        %455 = vst [vmem:[%s202 + $0x28] sm:$0xff] %v407
        %456 = vst [vmem:[%s202 + $0x30] sm:$0xff] %v412
        %457 = vst [vmem:[%s202 + $0x38] sm:$0xff] %v415
        %458 = vst [vmem:[%s202 + $0x40] sm:$0xff] %v420
        %459 = vst [vmem:[%s202 + $0x48] sm:$0xff] %v423
        %460 = vst [vmem:[%s202 + $0x50] sm:$0xff] %v428
        %461 = vst [vmem:[%s202 + $0x58] sm:$0xff] %v431
        %462 = vst [vmem:[%s202 + $0x60] sm:$0xff] %v436
        %463 = vst [vmem:[%s202 + $0x68] sm:$0xff] %v439
        %464 = vst [vmem:[%s202 + $0x70] sm:$0xff] %v444
        %465 = vst [vmem:[%s202 + $0x78] sm:$0xff] %v447
        %s466 = sand.u32 %s117, 1
        %s467 = scalar_lea.sflag [#allocation3], %s466
        %s468 = sand.u32 %s117, 1
        %s469 = smul.addr %s468, 128
        %s470 = scalar_lea.vmem [#allocation2], %s469
        // Predicated region
        $region33: #{graph_convolution.3} parent=31 // pred_check
          %p471 = pneg %p127
        $region34: #{graph_convolution.3} parent=31 // pred_check_branch
          %473 = sbr.rel (%p471) target = $region36
        $region35: #{graph_convolution.3} parent=31 // pred_region
          %s474 = smul.u32 16, %s21
          %s476 = ssub.s32 2048, 2048
          %477 = vsyncadd %s467, %s476
          %s478 = sadd.s32 %s22, %s474
          %s479 = smul.addr %s478, 128
          %s480 = scalar_lea.hbm %s3, %s479
          %s481 = sshll.u32 %s470, 4
          %s482 = int_to_ptr.vmem [resolvable:$true] %s481
          %487 = dma.vmem_to_hbm [thread:$0]  %s482, 2048, %s480, %s467, 128, 128, 8
        $region36: #{graph_convolution.3} parent=31 // pred_fallthru
          _
      $region32: #{graph_convolution.3} parent=5 // pred_fallthru
        _
      %p488 = scmp.le.s32.totalorder 2, %s12
      // Predicated region
      $region37: #{graph_convolution.3} parent=5 // pred_check
        %p489 = pneg %p488
      $region38: #{graph_convolution.3} parent=5 // pred_check_branch
        %491 = sbr.rel (%p489) target = $region40
      $region39: #{graph_convolution.3} parent=5 // pred_region
        %s492 = ssub.s32 %s12, 2
        // Predicated region
        $region41: #{graph_convolution.3} parent=39 // pred_check
          %p493 = pneg %p133
        $region42: #{graph_convolution.3} parent=39 // pred_check_branch
          %495 = sbr.rel (%p493) target = $region44
        $region43: #{graph_convolution.3} parent=39 // pred_region
          %s496 = sand.u32 %s118, 1
          %s497 = scalar_lea.sflag [#allocation3], %s496
          %s498 = sand.u32 %s118, 1
          %s499 = smul.addr %s498, 128
          %s500 = scalar_lea.vmem [#allocation2], %s499
          %501 = dma.done %s497, 2048
        $region44: #{graph_convolution.3} parent=39 // pred_fallthru
          _
      $region40: #{graph_convolution.3} parent=5 // pred_fallthru
        _
    $region6: #{graph_convolution.3} parent=1 // loop_footer
      %s16 = sadd.s32 1, %s12
    $region7: #{graph_convolution.3} parent=1 // loop_footer_branch
      %11 = sbr.rel target = $region3
    $region8: #{graph_convolution.3} parent=1 // loop_exit
      _
    %502 = vsyncpa [#allocation3], 1
    %s503 = scalar_lea.sflag [#allocation3], 1
    %504 = vsyncpa %s503, 1

// kernel: graph_convolution.2
$region0: #{graph_convolution.2}
  #allocation0 [shape = 'u32[]', space=smem, size = 0x4, offset = 0x4, fixed_abs, tag = 'smem constant byte address 0x4 - core index']
  #allocation1 [shape = 'u32[144,128]{1,0:T(1,128)}', space=vmem, size = 0x12000, scoped, tag = 'internal scratch']
  %s0 = inlined_call_operand.vmem [shape: bf16[256,256], index: 0, kind: input, shape index: {}]
  %s1 = inlined_call_operand.vmem [shape: bf16[256,128], index: 1, kind: input, shape index: {}]
  %s2 = inlined_call_operand.vmem [shape: bf16[256,128], index: 2, kind: output, shape index: {}]
  %s3 = sld [smem:[#allocation0]]
  $region41: #{graph_convolution.2} parent=0
    _
  %s5 = ssub.s32 1, %s3
  %s6 = scalar_select 0, %s5, %s3
  loop: start=0, step=1, limit=4
  $region2: #{graph_convolution.2} parent=0 // loop_pre_header
    _
  $region3: #{graph_convolution.2} parent=0 // loop_header
    %s8 = sphi 0, %s12
    %p9 = scmp.ge.s32.totalorder %s8, 4
    %s15 = sphi 0, %s27
    %s16 = sphi 0, %s23
    %s17 = sphi 0, %s15
    %s18 = sphi 0, %s16
    %s19 = sphi 0, %s17
    %s20 = sphi 0, %s18
    %s30 = sphi 0, %s32
    %s33 = sphi 0, %s30
    %s34 = sphi 0, %s33
    %s50 = sphi 0, %s34
    %s56 = sphi 0, %s58
    %s59 = sphi 0, %s56
    %s60 = sphi 0, %s59
    %s76 = sphi 0, %s60
    %s84 = sphi 0, %s86
    %s87 = sphi 0, %s84
    %s88 = sphi 0, %s87
    %s104 = sphi 0, %s88
  $region4: #{graph_convolution.2} parent=0 // loop_header_branch
    %11 = sbr.rel (%p9) target = $region8
  $region5: #{graph_convolution.2} parent=0 // loop_body
    %s13 = ssub.s32 %s8, 1
    %s14 = ssub.s32 %s8, 2
    %s21 = sadd.s32 1, %s16
    %p22 = scmp.ge.s32.totalorder %s21, 1
    %s23 = scalar_select %p22, 0, %s21
    %s24 = sadd.s32 1, %s15
    %s25 = scalar_select %p22, %s24, %s15
    %p26 = scmp.ge.s32.totalorder %s25, 2
    %s27 = scalar_select %p26, 0, %s25
    %s28 = ssub.s32 %s15, %s27
    %p29 = scmp.eq.s32.totalorder %s28, 0
    %s31 = sadd.s32 %s30, 1
    %s32 = scalar_select %p29, %s30, %s31
    %p35 = pneg %p29
    %p36 = scmp.eq.s32.totalorder %s8, 1
    %p37 = por %p35, %p36
    %p38 = scmp.ne.s32.totalorder %s30, %s33
    %p39 = scmp.eq.s32.totalorder %s8, 0
    %p40 = por %p38, %p39
    %p41 = scmp.ne.s32.totalorder %s30, %s33
    %p42 = scmp.eq.s32.totalorder %s13, 1
    %p43 = por %p41, %p42
    %p44 = scmp.ne.s32.totalorder %s33, %s34
    %p45 = scmp.eq.s32.totalorder %s13, 0
    %p46 = por %p44, %p45
    %p47 = scmp.ne.s32.totalorder %s33, %s34
    %p48 = scmp.eq.s32.totalorder %s14, 1
    %p49 = por %p47, %p48
    %p51 = scmp.ne.s32.totalorder %s34, %s50
    %p52 = scmp.eq.s32.totalorder %s14, 0
    %p53 = por %p51, %p52
    %s54 = ssub.s32 %s16, %s23
    %p55 = scmp.eq.s32.totalorder %s54, 0
    %s57 = sadd.s32 %s56, 1
    %s58 = scalar_select %p55, %s56, %s57
    %p61 = pneg %p55
    %p62 = scmp.eq.s32.totalorder %s8, 1
    %p63 = por %p61, %p62
    %p64 = scmp.ne.s32.totalorder %s56, %s59
    %p65 = scmp.eq.s32.totalorder %s8, 0
    %p66 = por %p64, %p65
    %p67 = scmp.ne.s32.totalorder %s56, %s59
    %p68 = scmp.eq.s32.totalorder %s13, 1
    %p69 = por %p67, %p68
    %p70 = scmp.ne.s32.totalorder %s59, %s60
    %p71 = scmp.eq.s32.totalorder %s13, 0
    %p72 = por %p70, %p71
    %p73 = scmp.ne.s32.totalorder %s59, %s60
    %p74 = scmp.eq.s32.totalorder %s14, 1
    %p75 = por %p73, %p74
    %p77 = scmp.ne.s32.totalorder %s60, %s76
    %p78 = scmp.eq.s32.totalorder %s14, 0
    %p79 = por %p77, %p78
    %s80 = ssub.s32 %s15, %s27
    %s81 = ssub.s32 %s16, %s23
    %s82 = sor.u32 %s80, %s81
    %p83 = scmp.eq.s32.totalorder %s82, 0
    %s85 = sadd.s32 %s84, 1
    %s86 = scalar_select %p83, %s84, %s85
    %p89 = pneg %p83
    %p90 = scmp.eq.s32.totalorder %s8, 1
    %p91 = por %p89, %p90
    %p92 = scmp.ne.s32.totalorder %s84, %s87
    %p93 = scmp.eq.s32.totalorder %s8, 0
    %p94 = por %p92, %p93
    %p95 = scmp.ne.s32.totalorder %s84, %s87
    %p96 = scmp.eq.s32.totalorder %s13, 1
    %p97 = por %p95, %p96
    %p98 = scmp.ne.s32.totalorder %s87, %s88
    %p99 = scmp.eq.s32.totalorder %s13, 0
    %p100 = por %p98, %p99
    %p101 = scmp.ne.s32.totalorder %s87, %s88
    %p102 = scmp.eq.s32.totalorder %s14, 1
    %p103 = por %p101, %p102
    %p105 = scmp.ne.s32.totalorder %s88, %s104
    %p106 = scmp.eq.s32.totalorder %s14, 0
    %p107 = por %p105, %p106
    %p108 = scmp.le.s32.totalorder 1, %s8
    %p109 = scmp.lt.s32.totalorder %s8, 3
    %p110 = pnand %p108, %p109
    %p111 = pneg %p110
    // Predicated region
    $region9: #{graph_convolution.2} parent=5 // pred_check
      _
    $region10: #{graph_convolution.2} parent=5 // pred_check_branch
      %113 = sbr.rel (%p110) target = $region12
    $region11: #{graph_convolution.2} parent=5 // pred_region
      %s114 = ssub.s32 %s8, 1
      // Predicated region
      $region13: #{graph_convolution.2} parent=11 // pred_check
        %p115 = pneg %p72
      $region14: #{graph_convolution.2} parent=11 // pred_check_branch
        %117 = sbr.rel (%p115) target = $region16
      $region15: #{graph_convolution.2} parent=11 // pred_region
        %p118 = scmp.lt.s32.totalorder %s18, 0
        %s119 = scalar_select %p118, %s18, 0
        %s120 = smul.addr %s119, 4
        %s121 = scalar_lea.vmem %s1, %s120
      $region16: #{graph_convolution.2} parent=11 // pred_fallthru
        _
    $region12: #{graph_convolution.2} parent=5 // pred_fallthru
      _
    %p122 = scmp.lt.s32.totalorder %s8, 2
    // Predicated region
    $region17: #{graph_convolution.2} parent=5 // pred_check
      %p123 = pneg %p122
    $region18: #{graph_convolution.2} parent=5 // pred_check_branch
      %125 = sbr.rel (%p123) target = $region20
    $region19: #{graph_convolution.2} parent=5 // pred_region
      // Predicated region
      $region21: #{graph_convolution.2} parent=19 // pred_check
        %p126 = pneg %p40
      $region22: #{graph_convolution.2} parent=19 // pred_check_branch
        %128 = sbr.rel (%p126) target = $region24
      $region23: #{graph_convolution.2} parent=19 // pred_region
        %s129 = smul.u32 16, %s15
        %p130 = scmp.lt.s32.totalorder %s129, 31
        %s131 = scalar_select %p130, %s129, 31
        %s132 = smul.addr %s131, 2
        %s133 = smul.addr %s132, 4
        %s134 = scalar_lea.vmem %s0, %s133
        %s135 = smul.u32 16, %s15
      $region24: #{graph_convolution.2} parent=19 // pred_fallthru
        _
    $region20: #{graph_convolution.2} parent=5 // pred_fallthru
      _
    %p136 = scmp.le.s32.totalorder 1, %s8
    %p137 = scmp.lt.s32.totalorder %s8, 3
    %p138 = pnand %p136, %p137
    %p139 = pneg %p138
    // Predicated region
    $region25: #{graph_convolution.2} parent=5 // pred_check
      _
    $region26: #{graph_convolution.2} parent=5 // pred_check_branch
      %141 = sbr.rel (%p138) target = $region28
    $region27: #{graph_convolution.2} parent=5 // pred_region
      %s142 = ssub.s32 %s8, 1
      %s143 = smul.u32 16, %s17
      %p144 = scmp.lt.s32.totalorder %s143, 31
      %s145 = scalar_select %p144, %s143, 31
      %s146 = smul.addr %s145, 2
      %s147 = smul.addr %s146, 4
      %s148 = scalar_lea.vmem %s0, %s147
      %p149 = pneg %p46
      %p150 = pneg %p43
      %p151 = scmp.lt.s32.totalorder %s18, 0
      %s152 = scalar_select %p151, %s18, 0
      %s153 = smul.addr %s152, 4
      %s154 = scalar_lea.vmem %s1, %s153
      %p155 = pneg %p72
      %p156 = pneg %p69
      %p157 = pneg %p100
      %p158 = pneg %p97
      %s159 = smul.u32 16, %s17
      %p160 = scmp.lt.s32.totalorder %s159, 31
      %s161 = scalar_select %p160, %s159, 31
      %p162 = scmp.lt.s32.totalorder %s18, 0
      %s163 = scalar_select %p162, %s18, 0
      %s164 = sadd.s32 %s163, %s161
      %s165 = smul.addr %s164, 4
      %s166 = scalar_lea.vmem %s2, %s165
      %s167 = smul.u32 16, %s17
      %p168 = scmp.lt.s32.totalorder %s167, 31
      %s169 = scalar_select %p168, %s167, 31
      %s170 = smul.addr %s169, 2
      %s171 = smul.addr %s170, 4
      %s172 = scalar_lea.vmem %s0, %s171
      %s173 = smul.u32 16, %s17
      %p174 = scmp.lt.s32.totalorder %s18, 0
      %s175 = scalar_select %p174, %s18, 0
      %s176 = smul.addr %s175, 4
      %s177 = scalar_lea.vmem %s1, %s176
      %s178 = smul.u32 16, %s17
      %p179 = scmp.lt.s32.totalorder %s178, 31
      %s180 = scalar_select %p179, %s178, 31
      %p181 = scmp.lt.s32.totalorder %s18, 0
      %s182 = scalar_select %p181, %s18, 0
      %s183 = sadd.s32 %s182, %s180
      %s184 = smul.addr %s183, 4
      %s185 = scalar_lea.vmem %s2, %s184
      %s186 = smul.u32 16, %s17
      %v188 = vld [vmem:[%s172] sm:$0xff]
      %v189 = vld [vmem:[%s172 + $0x8] sm:$0xff]
      %v190 = vld [vmem:[%s172 + $0x10] sm:$0xff]
      %v191 = vld [vmem:[%s172 + $0x18] sm:$0xff]
      %v192 = vld [vmem:[%s172 + $0x20] sm:$0xff]
      %v193 = vld [vmem:[%s172 + $0x28] sm:$0xff]
      %v194 = vld [vmem:[%s172 + $0x30] sm:$0xff]
      %v195 = vld [vmem:[%s172 + $0x38] sm:$0xff]
      %v196 = vld [vmem:[%s172 + $0x40] sm:$0xff]
      %v197 = vld [vmem:[%s172 + $0x48] sm:$0xff]
      %v198 = vld [vmem:[%s172 + $0x50] sm:$0xff]
      %v199 = vld [vmem:[%s172 + $0x58] sm:$0xff]
      %v200 = vld [vmem:[%s172 + $0x60] sm:$0xff]
      %v201 = vld [vmem:[%s172 + $0x68] sm:$0xff]
      %v202 = vld [vmem:[%s172 + $0x70] sm:$0xff]
      %v203 = vld [vmem:[%s172 + $0x78] sm:$0xff]
      %v204 = vld [vmem:[%s177] sm:$0xf]
      %v205 = vld [vmem:[%s177 + $0x4] sm:$0xf]
      %v206 = vld [vmem:[%s177 + $0x8] sm:$0xf]
      %v207 = vld [vmem:[%s177 + $0xc] sm:$0xf]
      %v208 = vld [vmem:[%s177 + $0x10] sm:$0xf]
      %v209 = vld [vmem:[%s177 + $0x14] sm:$0xf]
      %v210 = vld [vmem:[%s177 + $0x18] sm:$0xf]
      %v211 = vld [vmem:[%s177 + $0x1c] sm:$0xf]
      %v212 = vld [vmem:[%s177 + $0x20] sm:$0xf]
      %v213 = vld [vmem:[%s177 + $0x24] sm:$0xf]
      %v214 = vld [vmem:[%s177 + $0x28] sm:$0xf]
      %v215 = vld [vmem:[%s177 + $0x2c] sm:$0xf]
      %v216 = vld [vmem:[%s177 + $0x30] sm:$0xf]
      %v217 = vld [vmem:[%s177 + $0x34] sm:$0xf]
      %v218 = vld [vmem:[%s177 + $0x38] sm:$0xf]
      %v219 = vld [vmem:[%s177 + $0x3c] sm:$0xf]
      %v220 = vld [vmem:[%s177 + $0x40] sm:$0xf]
      %v221 = vld [vmem:[%s177 + $0x44] sm:$0xf]
      %v222 = vld [vmem:[%s177 + $0x48] sm:$0xf]
      %v223 = vld [vmem:[%s177 + $0x4c] sm:$0xf]
      %v224 = vld [vmem:[%s177 + $0x50] sm:$0xf]
      %v225 = vld [vmem:[%s177 + $0x54] sm:$0xf]
      %v226 = vld [vmem:[%s177 + $0x58] sm:$0xf]
      %v227 = vld [vmem:[%s177 + $0x5c] sm:$0xf]
      %v228 = vld [vmem:[%s177 + $0x60] sm:$0xf]
      %v229 = vld [vmem:[%s177 + $0x64] sm:$0xf]
      %v230 = vld [vmem:[%s177 + $0x68] sm:$0xf]
      %v231 = vld [vmem:[%s177 + $0x6c] sm:$0xf]
      %v232 = vld [vmem:[%s177 + $0x70] sm:$0xf]
      %v233 = vld [vmem:[%s177 + $0x74] sm:$0xf]
      %v234 = vld [vmem:[%s177 + $0x78] sm:$0xf]
      %v235 = vld [vmem:[%s177 + $0x7c] sm:$0xf]
      %v252 = vunpack.c.l.b16 %v188
      %v253 = vunpack.c.h.b16 %v188
      %v254 = vunpack.c.l.b16 %v189
      %v255 = vunpack.c.h.b16 %v189
      %v256 = vunpack.c.l.b16 %v190
      %v257 = vunpack.c.h.b16 %v190
      %v258 = vunpack.c.l.b16 %v191
      %v259 = vunpack.c.h.b16 %v191
      %v260 = vunpack.c.l.b16 %v192
      %v261 = vunpack.c.h.b16 %v192
      %v262 = vunpack.c.l.b16 %v193
      %v263 = vunpack.c.h.b16 %v193
      %v264 = vunpack.c.l.b16 %v194
      %v265 = vunpack.c.h.b16 %v194
      %v266 = vunpack.c.l.b16 %v195
      %v267 = vunpack.c.h.b16 %v195
      %v268 = vunpack.c.l.b16 %v196
      %v269 = vunpack.c.h.b16 %v196
      %v270 = vunpack.c.l.b16 %v197
      %v271 = vunpack.c.h.b16 %v197
      %v272 = vunpack.c.l.b16 %v198
      %v273 = vunpack.c.h.b16 %v198
      %v274 = vunpack.c.l.b16 %v199
      %v275 = vunpack.c.h.b16 %v199
      %v276 = vunpack.c.l.b16 %v200
      %v277 = vunpack.c.h.b16 %v200
      %v278 = vunpack.c.l.b16 %v201
      %v279 = vunpack.c.h.b16 %v201
      %v280 = vunpack.c.l.b16 %v202
      %v281 = vunpack.c.h.b16 %v202
      %v282 = vunpack.c.l.b16 %v203
      %v283 = vunpack.c.h.b16 %v203
      %v284 = vpack.c.b16 %v254, %v252
      %v285 = vpack.c.b16 %v255, %v253
      %v286 = vpack.c.b16 %v258, %v256
      %v287 = vpack.c.b16 %v259, %v257
      %v288 = vpack.c.b16 %v262, %v260
      %v289 = vpack.c.b16 %v263, %v261
      %v290 = vpack.c.b16 %v266, %v264
      %v291 = vpack.c.b16 %v267, %v265
      %v292 = vpack.c.b16 %v270, %v268
      %v293 = vpack.c.b16 %v271, %v269
      %v294 = vpack.c.b16 %v274, %v272
      %v295 = vpack.c.b16 %v275, %v273
      %v296 = vpack.c.b16 %v278, %v276
      %v297 = vpack.c.b16 %v279, %v277
      %v298 = vpack.c.b16 %v282, %v280
      %v299 = vpack.c.b16 %v283, %v281
      %v348 = vunpack.c.l.b16 %v204
      %v349 = vunpack.c.l.b16 %v205
      %v350 = vunpack.c.l.b16 %v206
      %v351 = vunpack.c.l.b16 %v207
      %v352 = vunpack.c.l.b16 %v208
      %v353 = vunpack.c.l.b16 %v209
      %v354 = vunpack.c.l.b16 %v210
      %v355 = vunpack.c.l.b16 %v211
      %v356 = vunpack.c.l.b16 %v212
      %v357 = vunpack.c.l.b16 %v213
      %v358 = vunpack.c.l.b16 %v214
      %v359 = vunpack.c.l.b16 %v215
      %v360 = vunpack.c.l.b16 %v216
      %v361 = vunpack.c.l.b16 %v217
      %v362 = vunpack.c.l.b16 %v218
      %v363 = vunpack.c.l.b16 %v219
      %v364 = vunpack.c.l.b16 %v220
      %v365 = vunpack.c.l.b16 %v221
      %v366 = vunpack.c.l.b16 %v222
      %v367 = vunpack.c.l.b16 %v223
      %v368 = vunpack.c.l.b16 %v224
      %v369 = vunpack.c.l.b16 %v225
      %v370 = vunpack.c.l.b16 %v226
      %v371 = vunpack.c.l.b16 %v227
      %v372 = vunpack.c.l.b16 %v228
      %v373 = vunpack.c.l.b16 %v229
      %v374 = vunpack.c.l.b16 %v230
      %v375 = vunpack.c.l.b16 %v231
      %v376 = vunpack.c.l.b16 %v232
      %v377 = vunpack.c.l.b16 %v233
      %v378 = vunpack.c.l.b16 %v234
      %v379 = vunpack.c.l.b16 %v235
      %v380 = vpack.c.b16 %v349, %v348
      %v381 = vpack.c.b16 %v351, %v350
      %v382 = vpack.c.b16 %v353, %v352
      %v383 = vpack.c.b16 %v355, %v354
      %v384 = vpack.c.b16 %v357, %v356
      %v385 = vpack.c.b16 %v359, %v358
      %v386 = vpack.c.b16 %v361, %v360
      %v387 = vpack.c.b16 %v363, %v362
      %v388 = vpack.c.b16 %v365, %v364
      %v389 = vpack.c.b16 %v367, %v366
      %v390 = vpack.c.b16 %v369, %v368
      %v391 = vpack.c.b16 %v371, %v370
      %v392 = vpack.c.b16 %v373, %v372
      %v393 = vpack.c.b16 %v375, %v374
      %v394 = vpack.c.b16 %v377, %v376
      %v395 = vpack.c.b16 %v379, %v378
      %412 = vmatprep.subr.bf16.mxu0 0
      %413 = vmatpush1.bf16.msra.mxu0 %v387
      %414 = vmatprep.subr.bf16.mxu0 0
      %415 = vmatpush1.bf16.msra.mxu0 %v386
      %416 = vmatprep.subr.bf16.mxu0 0
      %417 = vmatpush1.bf16.msra.mxu0 %v385
      %418 = vmatprep.subr.bf16.mxu0 0
      %419 = vmatpush1.bf16.msra.mxu0 %v384
      %420 = vmatprep.subr.bf16.mxu0 0
      %421 = vmatpush1.bf16.msra.mxu0 %v383
      %422 = vmatprep.subr.bf16.mxu0 0
      %423 = vmatpush1.bf16.msra.mxu0 %v382
      %424 = vmatprep.subr.bf16.mxu0 0
      %425 = vmatpush1.bf16.msra.mxu0 %v381
      %426 = vmatprep.subr.bf16.mxu0 0
      %427 = vmatpush1.bf16.msra.mxu0 %v380
      %428 = vmatprep.subr.bf16.mxu0 0
      %429 = vmatpush2.bf16.msra.mxu0 %v395
      %430 = vmatprep.subr.bf16.mxu0 0
      %431 = vmatpush2.bf16.msra.mxu0 %v394
      %432 = vmatprep.subr.bf16.mxu0 0
      %433 = vmatpush2.bf16.msra.mxu0 %v393
      %434 = vmatprep.subr.bf16.mxu0 0
      %435 = vmatpush2.bf16.msra.mxu0 %v392
      %436 = vmatprep.subr.bf16.mxu0 0
      %437 = vmatpush2.bf16.msra.mxu0 %v391
      %438 = vmatprep.subr.bf16.mxu0 0
      %439 = vmatpush2.bf16.msra.mxu0 %v390
      %440 = vmatprep.subr.bf16.mxu0 0
      %441 = vmatpush2.bf16.msra.mxu0 %v389
      %442 = vmatprep.subr.bf16.mxu0 0
      %443 = vmatpush2.bf16.msra.mxu0 %v388
      %444 = vmatprep.mubr.bf16.mxu0 %v285
      %445 = vmatmul.mubr.bf16.gmra.mxu0 %v284
      %v446 = vpop.f32.mrf.mxu0
      %v447 = vadd.f32 0.0, %v446
      %v448 = vpop.f32.mrf.mxu0
      %v449 = vpop.f32.mrf.mxu0
      %v450 = vadd.f32 0.0, %v449
      %v451 = vpop.f32.mrf.mxu0
      %452 = vmatprep.mubr.bf16.mxu0 %v287
      %453 = vmatmul.mubr.bf16.gmra.mxu0 %v286
      %v454 = vpop.f32.mrf.mxu0
      %v455 = vadd.f32 0.0, %v454
      %v456 = vpop.f32.mrf.mxu0
      %v457 = vpop.f32.mrf.mxu0
      %v458 = vadd.f32 0.0, %v457
      %v459 = vpop.f32.mrf.mxu0
      %460 = vmatprep.mubr.bf16.mxu0 %v289
      %461 = vmatmul.mubr.bf16.gmra.mxu0 %v288
      %v462 = vpop.f32.mrf.mxu0
      %v463 = vadd.f32 0.0, %v462
      %v464 = vpop.f32.mrf.mxu0
      %v465 = vpop.f32.mrf.mxu0
      %v466 = vadd.f32 0.0, %v465
      %v467 = vpop.f32.mrf.mxu0
      %468 = vmatprep.mubr.bf16.mxu0 %v291
      %469 = vmatmul.mubr.bf16.gmra.mxu0 %v290
      %v470 = vpop.f32.mrf.mxu0
      %v471 = vadd.f32 0.0, %v470
      %v472 = vpop.f32.mrf.mxu0
      %v473 = vpop.f32.mrf.mxu0
      %v474 = vadd.f32 0.0, %v473
      %v475 = vpop.f32.mrf.mxu0
      %476 = vmatprep.mubr.bf16.mxu0 %v293
      %477 = vmatmul.mubr.bf16.gmra.mxu0 %v292
      %v478 = vpop.f32.mrf.mxu0
      %v479 = vadd.f32 0.0, %v478
      %v480 = vpop.f32.mrf.mxu0
      %v481 = vpop.f32.mrf.mxu0
      %v482 = vadd.f32 0.0, %v481
      %v483 = vpop.f32.mrf.mxu0
      %484 = vmatprep.mubr.bf16.mxu0 %v295
      %485 = vmatmul.mubr.bf16.gmra.mxu0 %v294
      %v486 = vpop.f32.mrf.mxu0
      %v487 = vadd.f32 0.0, %v486
      %v488 = vpop.f32.mrf.mxu0
      %v489 = vpop.f32.mrf.mxu0
      %v490 = vadd.f32 0.0, %v489
      %v491 = vpop.f32.mrf.mxu0
      %492 = vmatprep.mubr.bf16.mxu0 %v297
      %493 = vmatmul.mubr.bf16.gmra.mxu0 %v296
      %v494 = vpop.f32.mrf.mxu0
      %v495 = vadd.f32 0.0, %v494
      %v496 = vpop.f32.mrf.mxu0
      %v497 = vpop.f32.mrf.mxu0
      %v498 = vadd.f32 0.0, %v497
      %v499 = vpop.f32.mrf.mxu0
      %500 = vmatprep.mubr.bf16.mxu0 %v299
      %501 = vmatmul.mubr.bf16.gmra.mxu0 %v298
      %v502 = vpop.f32.mrf.mxu0
      %v503 = vadd.f32 0.0, %v502
      %v504 = vpop.f32.mrf.mxu0
      %v505 = vpop.f32.mrf.mxu0
      %v506 = vadd.f32 0.0, %v505
      %v507 = vpop.f32.mrf.mxu0
      %508 = vdwg.mxu0
      %v509 = vpack.c.bf16 %v450, %v447
      %v510 = vpack.c.bf16 %v458, %v455
      %v511 = vpack.c.bf16 %v466, %v463
      %v512 = vpack.c.bf16 %v474, %v471
      %v513 = vpack.c.bf16 %v482, %v479
      %v514 = vpack.c.bf16 %v490, %v487
      %v515 = vpack.c.bf16 %v498, %v495
      %v516 = vpack.c.bf16 %v506, %v503
      %v525 = vunpack.c.l.b16 %v509
      %v526 = vunpack.c.h.b16 %v509
      %v527 = vunpack.c.l.b16 %v510
      %v528 = vunpack.c.h.b16 %v510
      %v529 = vunpack.c.l.b16 %v511
      %v530 = vunpack.c.h.b16 %v511
      %v531 = vunpack.c.l.b16 %v512
      %v532 = vunpack.c.h.b16 %v512
      %v533 = vunpack.c.l.b16 %v513
      %v534 = vunpack.c.h.b16 %v513
      %v535 = vunpack.c.l.b16 %v514
      %v536 = vunpack.c.h.b16 %v514
      %v537 = vunpack.c.l.b16 %v515
      %v538 = vunpack.c.h.b16 %v515
      %v539 = vunpack.c.l.b16 %v516
      %v540 = vunpack.c.h.b16 %v516
      %v541 = vpack.c.b16 %v525, %v525
      %v542 = vpack.c.b16 %v526, %v526
      %v543 = vpack.c.b16 %v527, %v527
      %v544 = vpack.c.b16 %v528, %v528
      %v545 = vpack.c.b16 %v529, %v529
      %v546 = vpack.c.b16 %v530, %v530
      %v547 = vpack.c.b16 %v531, %v531
      %v548 = vpack.c.b16 %v532, %v532
      %v549 = vpack.c.b16 %v533, %v533
      %v550 = vpack.c.b16 %v534, %v534
      %v551 = vpack.c.b16 %v535, %v535
      %v552 = vpack.c.b16 %v536, %v536
      %v553 = vpack.c.b16 %v537, %v537
      %v554 = vpack.c.b16 %v538, %v538
      %v555 = vpack.c.b16 %v539, %v539
      %v556 = vpack.c.b16 %v540, %v540
      %573 = vst [vmem:[%s185] sm:$0xf] %v541
      %574 = vst [vmem:[%s185 + $0x4] sm:$0xf] %v542
      %575 = vst [vmem:[%s185 + $0x8] sm:$0xf] %v543
      %576 = vst [vmem:[%s185 + $0xc] sm:$0xf] %v544
      %577 = vst [vmem:[%s185 + $0x10] sm:$0xf] %v545
      %578 = vst [vmem:[%s185 + $0x14] sm:$0xf] %v546
      %579 = vst [vmem:[%s185 + $0x18] sm:$0xf] %v547
      %580 = vst [vmem:[%s185 + $0x1c] sm:$0xf] %v548
      %581 = vst [vmem:[%s185 + $0x20] sm:$0xf] %v549
      %582 = vst [vmem:[%s185 + $0x24] sm:$0xf] %v550
      %583 = vst [vmem:[%s185 + $0x28] sm:$0xf] %v551
      %584 = vst [vmem:[%s185 + $0x2c] sm:$0xf] %v552
      %585 = vst [vmem:[%s185 + $0x30] sm:$0xf] %v553
      %586 = vst [vmem:[%s185 + $0x34] sm:$0xf] %v554
      %587 = vst [vmem:[%s185 + $0x38] sm:$0xf] %v555
      %588 = vst [vmem:[%s185 + $0x3c] sm:$0xf] %v556
      %s589 = smul.u32 16, %s17
      %p590 = scmp.lt.s32.totalorder %s589, 31
      %s591 = scalar_select %p590, %s589, 31
      %p592 = scmp.lt.s32.totalorder %s18, 0
      %s593 = scalar_select %p592, %s18, 0
      %s594 = sadd.s32 %s593, %s591
      %s595 = smul.addr %s594, 4
      %s596 = scalar_lea.vmem %s2, %s595
      // Predicated region
      $region29: #{graph_convolution.2} parent=27 // pred_check
        %p597 = pneg %p97
      $region30: #{graph_convolution.2} parent=27 // pred_check_branch
        %599 = sbr.rel (%p597) target = $region32
      $region31: #{graph_convolution.2} parent=27 // pred_region
        %s600 = smul.u32 16, %s17
      $region32: #{graph_convolution.2} parent=27 // pred_fallthru
        _
    $region28: #{graph_convolution.2} parent=5 // pred_fallthru
      _
    %p601 = scmp.le.s32.totalorder 2, %s8
    // Predicated region
    $region33: #{graph_convolution.2} parent=5 // pred_check
      %p602 = pneg %p601
    $region34: #{graph_convolution.2} parent=5 // pred_check_branch
      %604 = sbr.rel (%p602) target = $region36
    $region35: #{graph_convolution.2} parent=5 // pred_region
      %s605 = ssub.s32 %s8, 2
      // Predicated region
      $region37: #{graph_convolution.2} parent=35 // pred_check
        %p606 = pneg %p103
      $region38: #{graph_convolution.2} parent=35 // pred_check_branch
        %608 = sbr.rel (%p606) target = $region40
      $region39: #{graph_convolution.2} parent=35 // pred_region
        %s609 = smul.u32 16, %s19
        %p610 = scmp.lt.s32.totalorder %s609, 31
        %s611 = scalar_select %p610, %s609, 31
        %p612 = scmp.lt.s32.totalorder %s20, 0
        %s613 = scalar_select %p612, %s20, 0
        %s614 = sadd.s32 %s613, %s611
        %s615 = smul.addr %s614, 4
        %s616 = scalar_lea.vmem %s2, %s615
      $region40: #{graph_convolution.2} parent=35 // pred_fallthru
        _
    $region36: #{graph_convolution.2} parent=5 // pred_fallthru
      _
  $region6: #{graph_convolution.2} parent=0 // loop_footer
    %s12 = sadd.s32 1, %s8
  $region7: #{graph_convolution.2} parent=0 // loop_footer_branch
    %7 = sbr.rel target = $region3
  $region8: #{graph_convolution.2} parent=0 // loop_exit
    _

</llo_original>
